<compile_context>
chip_gen: v5e
topology: v5e:2x2
jax: 0.10.0
libtpu: 0.0.40
codegen_flags: <defaults>
</compile_context>

<pallas_src>
import jax
import jax.numpy as jnp
from jax.experimental import pallas as pl
from jax.experimental.pallas import tpu as pltpu


def _round_up(n, m):
    return ((n + m - 1) // m) * m


def _pad2(a, rows, cols):
    pr = rows - a.shape[0]
    pc = cols - a.shape[1]
    if pr == 0 and pc == 0:
        return a
    return jnp.pad(a, ((0, pr), (0, pc)))


def _ae_kernel(x_ref,
               w1_ref, b1_ref,
               w2_ref, b2_ref,
               w3_ref, b3_ref,
               w4_ref, b4_ref,
               out_ref):
    """Fused AE forward for one (TM, Dx) batch tile. Weights stay resident."""
    cdt = w1_ref.dtype  # MXU compute dtype (bf16 or f32)

    # ---- encoder ----
    h = jnp.dot(x_ref[...], w1_ref[...], preferred_element_type=jnp.float32)
    h = jnp.maximum(h + b1_ref[...], 0.0)                                # ReLU (f32)
    h = jnp.dot(h.astype(cdt), w2_ref[...], preferred_element_type=jnp.float32)
    h = jnp.maximum(h + b2_ref[...], 0.0)                                # ReLU (f32)

    # ---- decoder ----
    h = jnp.dot(h.astype(cdt), w3_ref[...], preferred_element_type=jnp.float32)
    h = jnp.maximum(h + b3_ref[...], 0.0)                                # ReLU (f32)
    h = jnp.dot(h.astype(cdt), w4_ref[...], preferred_element_type=jnp.float32)
    out_ref[...] = jax.nn.sigmoid(h + b4_ref[...])                       # Sigmoid (f32)


def autoencoder_forward(x, params, *, tm=512, compute_dtype=jnp.bfloat16):
    """x: (B, x_dim) float32. params: (in, out) weights and (1, out) biases.

    Returns (B, x_dim) float32, identical semantics to the PyTorch module.
    """
    B, x_dim = x.shape
    h_dim1 = params["w1"].shape[1]
    h_dim2 = params["w2"].shape[1]

    # Lane-dense (multiple-of-128) padded feature dims.
    Dx = _round_up(x_dim, 128)
    D1 = _round_up(h_dim1, 128)
    D2 = _round_up(h_dim2, 128)

    itemsize = jnp.dtype(compute_dtype).itemsize
    # Sublane packing granularity: bf16 packs rows in pairs -> align batch
    # tiles to 16 rows; f32 needs 8.
    row_align = 16 if itemsize == 2 else 8

    # ---- choose TM so the resident footprint fits well under 64 MiB (v7x) ---
    weight_bytes = (Dx * D1 + D1 * D2 + D2 * D1 + D1 * Dx) * itemsize
    bias_bytes = (2 * D1 + D2 + Dx) * 4

    def tile_bytes(tm_rows):
        # double-buffered input tile + double-buffered f32 output tile
        io = 2 * tm_rows * Dx * itemsize + 2 * tm_rows * Dx * 4
        # f32 activation temporaries inside the kernel (h1..h4 live ranges)
        interm = 4 * tm_rows * max(Dx, D1, D2) * 4
        return io + interm

    budget = 40 << 20  # leave headroom below v7x's 64 MiB physical VMEM
    TM = _round_up(min(tm, _round_up(B, row_align)), row_align)
    while TM > row_align and weight_bytes + bias_bytes + tile_bytes(TM) > budget:
        TM = _round_up(TM // 2, row_align)

    Bp = _round_up(_round_up(B, row_align), TM)
    grid = (Bp // TM,)

    # Pad + cast parameters. Zero padding is exact: padded input columns are
    # zero, padded hidden columns stay zero through matmul+ReLU, padded
    # output columns are sliced off below.
    w1p = _pad2(params["w1"], Dx, D1).astype(compute_dtype)
    w2p = _pad2(params["w2"], D1, D2).astype(compute_dtype)
    w3p = _pad2(params["w3"], D2, D1).astype(compute_dtype)
    w4p = _pad2(params["w4"], D1, Dx).astype(compute_dtype)
    b1p = _pad2(params["b1"], 1, D1).astype(jnp.float32)
    b2p = _pad2(params["b2"], 1, D2).astype(jnp.float32)
    b3p = _pad2(params["b3"], 1, D1).astype(jnp.float32)
    b4p = _pad2(params["b4"], 1, Dx).astype(jnp.float32)
    xp = _pad2(x, Bp, Dx).astype(compute_dtype)

    # Activations: tiled over the batch grid. Weights/biases: constant block
    # index -> fetched once, VMEM-resident for every grid step.
    act_in_spec = pl.BlockSpec((TM, Dx), lambda i: (i, 0))
    act_out_spec = pl.BlockSpec((TM, Dx), lambda i: (i, 0))

    def resident(shape):
        return pl.BlockSpec(shape, lambda i: (0, 0))

    in_specs = [
        act_in_spec,
        resident((Dx, D1)), resident((1, D1)),
        resident((D1, D2)), resident((1, D2)),
        resident((D2, D1)), resident((1, D1)),
        resident((D1, Dx)), resident((1, Dx)),
    ]

    vmem_limit = int(min(max(2 * (weight_bytes + bias_bytes + tile_bytes(TM)),
                             8 << 20), 48 << 20))

    out_padded = pl.pallas_call(
        _ae_kernel,
        out_shape=jax.ShapeDtypeStruct((Bp, Dx), jnp.float32),
        grid=grid,
        in_specs=in_specs,
        out_specs=act_out_spec,
        compiler_params=pltpu.CompilerParams(
            dimension_semantics=("parallel",),
            vmem_limit_bytes=vmem_limit,
        ),
    )(xp, w1p, b1p, w2p, b2p, w3p, b3p, w4p, b4p)

    return out_padded[:B, :x_dim]


def init_params(key, x_dim, h_dim1, h_dim2):
    """PyTorch-style uniform(+-1/sqrt(fan_in)) init; weights stored as (in, out)."""
    def linear(k, fan_in, fan_out):
        kw, kb = jax.random.split(k)
        bound = 1.0 / jnp.sqrt(fan_in)
        w = jax.random.uniform(kw, (fan_in, fan_out), jnp.float32, -bound, bound)
        b = jax.random.uniform(kb, (1, fan_out), jnp.float32, -bound, bound)
        return w, b

    k1, k2, k3, k4 = jax.random.split(key, 4)
    w1, b1 = linear(k1, x_dim, h_dim1)   # encoder Linear(x_dim, h_dim1)
    w2, b2 = linear(k2, h_dim1, h_dim2)  # encoder Linear(h_dim1, h_dim2)
    w3, b3 = linear(k3, h_dim2, h_dim1)  # decoder Linear(h_dim2, h_dim1)
    w4, b4 = linear(k4, h_dim1, x_dim)   # decoder Linear(h_dim1, x_dim)
    return {"w1": w1, "b1": b1, "w2": w2, "b2": b2,
            "w3": w3, "b3": b3, "w4": w4, "b4": b4}


def reference_forward(x, p):
    h = jnp.maximum(x @ p["w1"] + p["b1"], 0.0)
    h = jnp.maximum(h @ p["w2"] + p["b2"], 0.0)
    h = jnp.maximum(h @ p["w3"] + p["b3"], 0.0)
    return jax.nn.sigmoid(h @ p["w4"] + p["b4"])


if __name__ == "__main__":
    # Small shapes consistent with the module (flattened-image MLP AE).
    # x_dim=200 / h_dim2=64 deliberately exercise the pad-to-128 path.
    batch, x_dim, h_dim1, h_dim2 = 24, 200, 128, 64

    key = jax.random.PRNGKey(0)
    k_x, k_p = jax.random.split(key)
    x = jax.random.uniform(k_x, (batch, x_dim), jnp.float32)   # "pixel" inputs in [0,1)
    params = init_params(k_p, x_dim, h_dim1, h_dim2)

    ref = reference_forward(x, params)

    # 1) f32 compute path: whole (padded) batch in a single tile.
    out_f32 = jax.block_until_ready(
        autoencoder_forward(x, params, tm=512, compute_dtype=jnp.float32))
    assert out_f32.shape == (batch, x_dim)
    assert jnp.allclose(out_f32, ref, atol=1e-5, rtol=1e-5)

    # 2) bf16 MXU path with a batch grid (TM=16 -> 2 steps): exercises the
    #    pipelined/tiled configuration used at real batch sizes.
    out_bf16 = jax.block_until_ready(
        autoencoder_forward(x, params, tm=16, compute_dtype=jnp.bfloat16))
    assert out_bf16.shape == (batch, x_dim)
    assert jnp.allclose(out_bf16, ref, atol=3e-2, rtol=3e-2)

    print("KERNEL_OK")
</pallas_src>

<mosaic_0001>
module attributes {stable_mosaic.version = 11 : i64} {
  func.func @_ae_kernel(%arg0: i32, %arg1: memref<24x256xf32, #tpu.memory_space<vmem>>, %arg2: memref<256x128xf32, #tpu.memory_space<vmem>>, %arg3: memref<1x128xf32, #tpu.memory_space<vmem>>, %arg4: memref<128x128xf32, #tpu.memory_space<vmem>>, %arg5: memref<1x128xf32, #tpu.memory_space<vmem>>, %arg6: memref<128x128xf32, #tpu.memory_space<vmem>>, %arg7: memref<1x128xf32, #tpu.memory_space<vmem>>, %arg8: memref<128x256xf32, #tpu.memory_space<vmem>>, %arg9: memref<1x256xf32, #tpu.memory_space<vmem>>, %arg10: memref<24x256xf32, #tpu.memory_space<vmem>>) attributes {dimension_semantics = [#tpu.dimension_semantics<parallel>], iteration_bounds = array<i64: 1>, scalar_prefetch = 0 : i64, scratch_operands = 0 : i64, tpu.core_type = #tpu.core_type<tc>, window_params = [{transform_indices = @transform_0, window_bounds = array<i64: 24, 256>}, {pipeline_mode = #tpu.pipeline_mode<synchronous>, transform_indices = @transform_1, window_bounds = array<i64: 256, 128>}, {pipeline_mode = #tpu.pipeline_mode<synchronous>, transform_indices = @transform_2, window_bounds = array<i64: 1, 128>}, {pipeline_mode = #tpu.pipeline_mode<synchronous>, transform_indices = @transform_3, window_bounds = array<i64: 128, 128>}, {pipeline_mode = #tpu.pipeline_mode<synchronous>, transform_indices = @transform_4, window_bounds = array<i64: 1, 128>}, {pipeline_mode = #tpu.pipeline_mode<synchronous>, transform_indices = @transform_5, window_bounds = array<i64: 128, 128>}, {pipeline_mode = #tpu.pipeline_mode<synchronous>, transform_indices = @transform_6, window_bounds = array<i64: 1, 128>}, {pipeline_mode = #tpu.pipeline_mode<synchronous>, transform_indices = @transform_7, window_bounds = array<i64: 128, 256>}, {pipeline_mode = #tpu.pipeline_mode<synchronous>, transform_indices = @transform_8, window_bounds = array<i64: 1, 256>}, {transform_indices = @transform_9, window_bounds = array<i64: 24, 256>}]} {
    %c0 = arith.constant 0 : index
    %c0_0 = arith.constant 0 : index
    %0 = vector.load %arg1[%c0, %c0_0] : memref<24x256xf32, #tpu.memory_space<vmem>>, vector<24x256xf32>
    %c0_1 = arith.constant 0 : index
    %c0_2 = arith.constant 0 : index
    %1 = vector.load %arg2[%c0_1, %c0_2] : memref<256x128xf32, #tpu.memory_space<vmem>>, vector<256x128xf32>
    %cst = arith.constant dense<0.000000e+00> : vector<24x128xf32>
    %2 = tpu.matmul %0, %1, %cst {dimension_numbers = #tpu.dot_dimension_numbers<[1], [0], [0], [1], [0, 0, 1, 1], [], []>} : vector<24x256xf32>, vector<256x128xf32>, vector<24x128xf32> -> vector<24x128xf32>
    %c0_3 = arith.constant 0 : index
    %c0_4 = arith.constant 0 : index
    %3 = vector.load %arg3[%c0_3, %c0_4] : memref<1x128xf32, #tpu.memory_space<vmem>>, vector<1x128xf32>
    %4 = vector.broadcast %3 : vector<1x128xf32> to vector<24x128xf32>
    %5 = arith.addf %2, %4 : vector<24x128xf32>
    %cst_5 = arith.constant 0.000000e+00 : f32
    %6 = vector.broadcast %cst_5 : f32 to vector<24x128xf32>
    %7 = arith.maximumf %5, %6 : vector<24x128xf32>
    %c0_6 = arith.constant 0 : index
    %c0_7 = arith.constant 0 : index
    %8 = vector.load %arg4[%c0_6, %c0_7] : memref<128x128xf32, #tpu.memory_space<vmem>>, vector<128x128xf32>
    %cst_8 = arith.constant dense<0.000000e+00> : vector<24x128xf32>
    %9 = tpu.matmul %7, %8, %cst_8 {dimension_numbers = #tpu.dot_dimension_numbers<[1], [0], [0], [1], [0, 0, 1, 1], [], []>} : vector<24x128xf32>, vector<128x128xf32>, vector<24x128xf32> -> vector<24x128xf32>
    %c0_9 = arith.constant 0 : index
    %c0_10 = arith.constant 0 : index
    %10 = vector.load %arg5[%c0_9, %c0_10] : memref<1x128xf32, #tpu.memory_space<vmem>>, vector<1x128xf32>
    %11 = vector.broadcast %10 : vector<1x128xf32> to vector<24x128xf32>
    %12 = arith.addf %9, %11 : vector<24x128xf32>
    %cst_11 = arith.constant 0.000000e+00 : f32
    %13 = vector.broadcast %cst_11 : f32 to vector<24x128xf32>
    %14 = arith.maximumf %12, %13 : vector<24x128xf32>
    %c0_12 = arith.constant 0 : index
    %c0_13 = arith.constant 0 : index
    %15 = vector.load %arg6[%c0_12, %c0_13] : memref<128x128xf32, #tpu.memory_space<vmem>>, vector<128x128xf32>
    %cst_14 = arith.constant dense<0.000000e+00> : vector<24x128xf32>
    %16 = tpu.matmul %14, %15, %cst_14 {dimension_numbers = #tpu.dot_dimension_numbers<[1], [0], [0], [1], [0, 0, 1, 1], [], []>} : vector<24x128xf32>, vector<128x128xf32>, vector<24x128xf32> -> vector<24x128xf32>
    %c0_15 = arith.constant 0 : index
    %c0_16 = arith.constant 0 : index
    %17 = vector.load %arg7[%c0_15, %c0_16] : memref<1x128xf32, #tpu.memory_space<vmem>>, vector<1x128xf32>
    %18 = vector.broadcast %17 : vector<1x128xf32> to vector<24x128xf32>
    %19 = arith.addf %16, %18 : vector<24x128xf32>
    %cst_17 = arith.constant 0.000000e+00 : f32
    %20 = vector.broadcast %cst_17 : f32 to vector<24x128xf32>
    %21 = arith.maximumf %19, %20 : vector<24x128xf32>
    %c0_18 = arith.constant 0 : index
    %c0_19 = arith.constant 0 : index
    %22 = vector.load %arg8[%c0_18, %c0_19] : memref<128x256xf32, #tpu.memory_space<vmem>>, vector<128x256xf32>
    %cst_20 = arith.constant dense<0.000000e+00> : vector<24x256xf32>
    %23 = tpu.matmul %21, %22, %cst_20 {dimension_numbers = #tpu.dot_dimension_numbers<[1], [0], [0], [1], [0, 0, 1, 1], [], []>} : vector<24x128xf32>, vector<128x256xf32>, vector<24x256xf32> -> vector<24x256xf32>
    %c0_21 = arith.constant 0 : index
    %c0_22 = arith.constant 0 : index
    %24 = vector.load %arg9[%c0_21, %c0_22] : memref<1x256xf32, #tpu.memory_space<vmem>>, vector<1x256xf32>
    %25 = vector.broadcast %24 : vector<1x256xf32> to vector<24x256xf32>
    %26 = arith.addf %23, %25 : vector<24x256xf32>
    %27 = arith.negf %26 : vector<24x256xf32>
    %28 = math.exp %27 : vector<24x256xf32>
    %cst_23 = arith.constant 1.000000e+00 : f32
    %29 = vector.broadcast %cst_23 : f32 to vector<24x256xf32>
    %30 = arith.addf %29, %28 : vector<24x256xf32>
    %31 = arith.divf %29, %30 : vector<24x256xf32>
    %c0_24 = arith.constant 0 : index
    %c0_25 = arith.constant 0 : index
    %32 = vector.load %arg10[%c0_24, %c0_25] : memref<24x256xf32, #tpu.memory_space<vmem>>, vector<24x256xf32>
    tpu.vector_store %arg10[%c0_24, %c0_25], %31 {strides = array<i32>} : memref<24x256xf32, #tpu.memory_space<vmem>>, vector<24x256xf32>,
    return
  }
  func.func @transform_0(%arg0: i32) -> (i32, i32) {
    %c0_i32 = arith.constant 0 : i32
    %c0_i32_0 = arith.constant 0 : i32
    return %arg0, %c0_i32 : i32, i32
  }
  func.func @transform_1(%arg0: i32) -> (i32, i32) {
    %c0_i32 = arith.constant 0 : i32
    %c0_i32_0 = arith.constant 0 : i32
    %c0_i32_1 = arith.constant 0 : i32
    return %c0_i32, %c0_i32_0 : i32, i32
  }
  func.func @transform_2(%arg0: i32) -> (i32, i32) {
    %c0_i32 = arith.constant 0 : i32
    %c0_i32_0 = arith.constant 0 : i32
    %c0_i32_1 = arith.constant 0 : i32
    return %c0_i32, %c0_i32_0 : i32, i32
  }
  func.func @transform_3(%arg0: i32) -> (i32, i32) {
    %c0_i32 = arith.constant 0 : i32
    %c0_i32_0 = arith.constant 0 : i32
    %c0_i32_1 = arith.constant 0 : i32
    return %c0_i32, %c0_i32_0 : i32, i32
  }
  func.func @transform_4(%arg0: i32) -> (i32, i32) {
    %c0_i32 = arith.constant 0 : i32
    %c0_i32_0 = arith.constant 0 : i32
    %c0_i32_1 = arith.constant 0 : i32
    return %c0_i32, %c0_i32_0 : i32, i32
  }
  func.func @transform_5(%arg0: i32) -> (i32, i32) {
    %c0_i32 = arith.constant 0 : i32
    %c0_i32_0 = arith.constant 0 : i32
    %c0_i32_1 = arith.constant 0 : i32
    return %c0_i32, %c0_i32_0 : i32, i32
  }
  func.func @transform_6(%arg0: i32) -> (i32, i32) {
    %c0_i32 = arith.constant 0 : i32
    %c0_i32_0 = arith.constant 0 : i32
    %c0_i32_1 = arith.constant 0 : i32
    return %c0_i32, %c0_i32_0 : i32, i32
  }
  func.func @transform_7(%arg0: i32) -> (i32, i32) {
    %c0_i32 = arith.constant 0 : i32
    %c0_i32_0 = arith.constant 0 : i32
    %c0_i32_1 = arith.constant 0 : i32
    return %c0_i32, %c0_i32_0 : i32, i32
  }
  func.func @transform_8(%arg0: i32) -> (i32, i32) {
    %c0_i32 = arith.constant 0 : i32
    %c0_i32_0 = arith.constant 0 : i32
    %c0_i32_1 = arith.constant 0 : i32
    return %c0_i32, %c0_i32_0 : i32, i32
  }
  func.func @transform_9(%arg0: i32) -> (i32, i32) {
    %c0_i32 = arith.constant 0 : i32
    %c0_i32_0 = arith.constant 0 : i32
    return %arg0, %c0_i32 : i32, i32
  }
}

</mosaic_0001>

<llo_original>
// kernel: tpu_custom_call.1
$region0: #{tpu_custom_call.1}
  #allocation0 [shape = 'u32[]', space=smem, size = 0x4, offset = 0x4, fixed_abs, tag = 'smem constant byte address 0x4 - core index']
  #allocation1 [shape = 'u32[72,128]{1,0:T(1,128)}', space=vmem, size = 0x9000, scoped, tag = 'internal scratch']
  %s0 = inlined_call_operand.hbm [shape: f32[24,256], index: 0, kind: input, shape index: {}]
  %s1 = inlined_call_operand.hbm [shape: f32[256,128], index: 1, kind: input, shape index: {}]
  %s2 = inlined_call_operand.vmem [shape: f32[1,128], index: 2, kind: input, shape index: {}]
  %s3 = inlined_call_operand.hbm [shape: f32[128,128], index: 3, kind: input, shape index: {}]
  %s4 = inlined_call_operand.hbm [shape: f32[1,128], index: 4, kind: input, shape index: {}]
  %s5 = inlined_call_operand.hbm [shape: f32[128,128], index: 5, kind: input, shape index: {}]
  %s6 = inlined_call_operand.vmem [shape: f32[1,128], index: 6, kind: input, shape index: {}]
  %s7 = inlined_call_operand.hbm [shape: f32[128,256], index: 7, kind: input, shape index: {}]
  %s8 = inlined_call_operand.vmem [shape: f32[1,256], index: 8, kind: input, shape index: {}]
  %s9 = inlined_call_operand.hbm [shape: f32[24,256], index: 9, kind: output, shape index: {}]
  %s10 = sld [smem:[#allocation0]]
  $region70: #{tpu_custom_call.1} parent=0
    _
  %s12 = ssub.s32 1, %s10
  %s13 = scalar_select 0, %s12, %s10
  $region1: #{tpu_custom_call.1} parent=0
    #allocation2 [shape = 'u8[24576]{0}', space=vmem, size = 0x6000, scoped, tag = 'input window, operand 0, single buffered']
    #allocation3 [shape = 's32[1]{0}', space=sflag, size = 0x4, scoped, tag = 'scoped memory for tpu_custom_call.1']
    #allocation4 [shape = 's32[1]{0}', space=sflag, size = 0x4, scoped, tag = 'scoped memory for tpu_custom_call.1']
    #allocation5 [shape = 'u8[131072]{0}', space=vmem, size = 0x20000, scoped, tag = 'input window, operand 1, single buffered']
    #allocation6 [shape = 's32[1]{0}', space=sflag, size = 0x4, scoped, tag = 'scoped memory for tpu_custom_call.1']
    #allocation7 [shape = 'u8[65536]{0}', space=vmem, size = 0x10000, scoped, tag = 'input window, operand 3, single buffered']
    #allocation8 [shape = 'u8[512]{0}', space=vmem, size = 0x400, scoped, tag = 'input window, operand 4, single buffered']
    #allocation9 [shape = 's32[1]{0}', space=sflag, size = 0x4, scoped, tag = 'scoped memory for tpu_custom_call.1']
    #allocation10 [shape = 'u8[65536]{0}', space=vmem, size = 0x10000, scoped, tag = 'input window, operand 5, single buffered']
    #allocation11 [shape = 'u8[131072]{0}', space=vmem, size = 0x20000, scoped, tag = 'input window, operand 7, single buffered']
    #allocation12 [shape = 's32[1]{0}', space=sflag, size = 0x4, scoped, tag = 'scoped memory for tpu_custom_call.1']
    #allocation13 [shape = 'u8[24576]{0}', space=vmem, size = 0x6000, scoped, tag = 'output window, operand 0, single buffered']
    %14 = vsyncpa [#allocation3], 0
    %15 = vsyncpa [#allocation6], 0
    %16 = vsyncpa [#allocation9], 0
    %17 = vsyncpa [#allocation12], 0
    %18 = vsyncpa [#allocation4], 0
    // Predicated region
    $region2: #{tpu_custom_call.1} parent=1 // pred_check
      _
    $region3: #{tpu_custom_call.1} parent=1 // pred_check_branch
      %20 = sbr.rel (0) target = $region5
    $region4: #{tpu_custom_call.1} parent=1 // pred_region
      %22 = vsyncadd [#allocation3], 0
      %s23 = sshll.u32 %s0, 4
      %s24 = int_to_ptr.hbm [resolvable:$true] %s23
      %s25 = sshll.u32 [#allocation2], 4
      %s26 = int_to_ptr.vmem [resolvable:$true] %s25
      %31 = dma.hbm_to_vmem [thread:$0]  %s24, 768, %s26, [#allocation3], 256, 256, 16
    $region5: #{tpu_custom_call.1} parent=1 // pred_fallthru
      _
    // Predicated region
    $region6: #{tpu_custom_call.1} parent=1 // pred_check
      _
    $region7: #{tpu_custom_call.1} parent=1 // pred_check_branch
      %33 = sbr.rel (0) target = $region9
    $region8: #{tpu_custom_call.1} parent=1 // pred_region
      %35 = vsyncadd [#allocation6], 0
      %s36 = sshll.u32 %s1, 4
      %s37 = int_to_ptr.hbm [resolvable:$true] %s36
      %s38 = sshll.u32 [#allocation5], 4
      %s39 = int_to_ptr.vmem [resolvable:$true] %s38
      %44 = dma.hbm_to_vmem [thread:$0]  %s37, 4096, %s39, [#allocation6], 128, 128, 8
    $region9: #{tpu_custom_call.1} parent=1 // pred_fallthru
      _
    // Predicated region
    $region10: #{tpu_custom_call.1} parent=1 // pred_check
      _
    $region11: #{tpu_custom_call.1} parent=1 // pred_check_branch
      %46 = sbr.rel (0) target = $region13
    $region12: #{tpu_custom_call.1} parent=1 // pred_region
      _
    $region13: #{tpu_custom_call.1} parent=1 // pred_fallthru
      _
    // Predicated region
    $region14: #{tpu_custom_call.1} parent=1 // pred_check
      _
    $region15: #{tpu_custom_call.1} parent=1 // pred_check_branch
      %48 = sbr.rel (0) target = $region17
    $region16: #{tpu_custom_call.1} parent=1 // pred_region
      %50 = vsyncadd [#allocation6], 0
      %s51 = sshll.u32 %s3, 4
      %s52 = int_to_ptr.hbm [resolvable:$true] %s51
      %s53 = sshll.u32 [#allocation7], 4
      %s54 = int_to_ptr.vmem [resolvable:$true] %s53
      %59 = dma.hbm_to_vmem [thread:$0]  %s52, 2048, %s54, [#allocation6], 128, 128, 8
    $region17: #{tpu_custom_call.1} parent=1 // pred_fallthru
      _
    // Predicated region
    $region18: #{tpu_custom_call.1} parent=1 // pred_check
      _
    $region19: #{tpu_custom_call.1} parent=1 // pred_check_branch
      %61 = sbr.rel (0) target = $region21
    $region20: #{tpu_custom_call.1} parent=1 // pred_region
      %63 = vsyncadd [#allocation9], 0
      %s65 = sshll.u32 %s4, 4
      %s66 = int_to_ptr.hbm [resolvable:$true] %s65
      %s67 = sshll.u32 [#allocation8], 4
      %s68 = int_to_ptr.vmem [resolvable:$true] %s67
      %70 = dma.hbm_to_vmem [thread:$0]  %s66, 16, %s68, [#allocation9]
    $region21: #{tpu_custom_call.1} parent=1 // pred_fallthru
      _
    // Predicated region
    $region22: #{tpu_custom_call.1} parent=1 // pred_check
      _
    $region23: #{tpu_custom_call.1} parent=1 // pred_check_branch
      %72 = sbr.rel (0) target = $region25
    $region24: #{tpu_custom_call.1} parent=1 // pred_region
      %74 = vsyncadd [#allocation9], 0
      %s75 = sshll.u32 %s5, 4
      %s76 = int_to_ptr.hbm [resolvable:$true] %s75
      %s77 = sshll.u32 [#allocation10], 4
      %s78 = int_to_ptr.vmem [resolvable:$true] %s77
      %83 = dma.hbm_to_vmem [thread:$0]  %s76, 2048, %s78, [#allocation9], 128, 128, 8
    $region25: #{tpu_custom_call.1} parent=1 // pred_fallthru
      _
    // Predicated region
    $region26: #{tpu_custom_call.1} parent=1 // pred_check
      _
    $region27: #{tpu_custom_call.1} parent=1 // pred_check_branch
      %85 = sbr.rel (0) target = $region29
    $region28: #{tpu_custom_call.1} parent=1 // pred_region
      _
    $region29: #{tpu_custom_call.1} parent=1 // pred_fallthru
      _
    // Predicated region
    $region30: #{tpu_custom_call.1} parent=1 // pred_check
      _
    $region31: #{tpu_custom_call.1} parent=1 // pred_check_branch
      %87 = sbr.rel (0) target = $region33
    $region32: #{tpu_custom_call.1} parent=1 // pred_region
      %89 = vsyncadd [#allocation12], 0
      %s90 = sshll.u32 %s7, 4
      %s91 = int_to_ptr.hbm [resolvable:$true] %s90
      %s92 = sshll.u32 [#allocation11], 4
      %s93 = int_to_ptr.vmem [resolvable:$true] %s92
      %98 = dma.hbm_to_vmem [thread:$0]  %s91, 4096, %s93, [#allocation12], 256, 256, 16
    $region33: #{tpu_custom_call.1} parent=1 // pred_fallthru
      _
    // Predicated region
    $region34: #{tpu_custom_call.1} parent=1 // pred_check
      _
    $region35: #{tpu_custom_call.1} parent=1 // pred_check_branch
      %100 = sbr.rel (0) target = $region37
    $region36: #{tpu_custom_call.1} parent=1 // pred_region
      _
    $region37: #{tpu_custom_call.1} parent=1 // pred_fallthru
      _
    // Predicated region
    $region38: #{tpu_custom_call.1} parent=1 // pred_check
      _
    $region39: #{tpu_custom_call.1} parent=1 // pred_check_branch
      %102 = sbr.rel (0) target = $region41
    $region40: #{tpu_custom_call.1} parent=1 // pred_region
      %104 = dma.done [#allocation3], 768
    $region41: #{tpu_custom_call.1} parent=1 // pred_fallthru
      _
    // Predicated region
    $region42: #{tpu_custom_call.1} parent=1 // pred_check
      _
    $region43: #{tpu_custom_call.1} parent=1 // pred_check_branch
      %106 = sbr.rel (0) target = $region45
    $region44: #{tpu_custom_call.1} parent=1 // pred_region
      %108 = dma.done [#allocation6], 4096
    $region45: #{tpu_custom_call.1} parent=1 // pred_fallthru
      _
    // Predicated region
    $region46: #{tpu_custom_call.1} parent=1 // pred_check
      _
    $region47: #{tpu_custom_call.1} parent=1 // pred_check_branch
      %110 = sbr.rel (0) target = $region49
    $region48: #{tpu_custom_call.1} parent=1 // pred_region
      %112 = dma.done [#allocation6], 2048
    $region49: #{tpu_custom_call.1} parent=1 // pred_fallthru
      _
    // Predicated region
    $region50: #{tpu_custom_call.1} parent=1 // pred_check
      _
    $region51: #{tpu_custom_call.1} parent=1 // pred_check_branch
      %114 = sbr.rel (0) target = $region53
    $region52: #{tpu_custom_call.1} parent=1 // pred_region
      %116 = dma.done [#allocation9], 16
    $region53: #{tpu_custom_call.1} parent=1 // pred_fallthru
      _
    // Predicated region
    $region54: #{tpu_custom_call.1} parent=1 // pred_check
      _
    $region55: #{tpu_custom_call.1} parent=1 // pred_check_branch
      %118 = sbr.rel (0) target = $region57
    $region56: #{tpu_custom_call.1} parent=1 // pred_region
      %120 = dma.done [#allocation9], 2048
    $region57: #{tpu_custom_call.1} parent=1 // pred_fallthru
      _
    // Predicated region
    $region58: #{tpu_custom_call.1} parent=1 // pred_check
      _
    $region59: #{tpu_custom_call.1} parent=1 // pred_check_branch
      %122 = sbr.rel (0) target = $region61
    $region60: #{tpu_custom_call.1} parent=1 // pred_region
      %124 = dma.done [#allocation12], 4096
    $region61: #{tpu_custom_call.1} parent=1 // pred_fallthru
      _
    %v125 = vld [vmem:[#allocation2] sm:$0xff]
    %v126 = vld [vmem:[#allocation2 + $0x8] sm:$0xff]
    %v127 = vld [vmem:[#allocation2 + $0x10] sm:$0xff]
    %v128 = vld [vmem:[#allocation2 + $0x18] sm:$0xff]
    %v129 = vld [vmem:[#allocation2 + $0x20] sm:$0xff]
    %v130 = vld [vmem:[#allocation2 + $0x28] sm:$0xff]
    %v131 = vld [vmem:[#allocation5] sm:$0xff]
    %v132 = vld [vmem:[#allocation5 + $0x8] sm:$0xff]
    %v133 = vld [vmem:[#allocation5 + $0x10] sm:$0xff]
    %v134 = vld [vmem:[#allocation5 + $0x18] sm:$0xff]
    %v135 = vld [vmem:[#allocation5 + $0x20] sm:$0xff]
    %v136 = vld [vmem:[#allocation5 + $0x28] sm:$0xff]
    %v137 = vld [vmem:[#allocation5 + $0x30] sm:$0xff]
    %v138 = vld [vmem:[#allocation5 + $0x38] sm:$0xff]
    %v139 = vld [vmem:[#allocation5 + $0x40] sm:$0xff]
    %v140 = vld [vmem:[#allocation5 + $0x48] sm:$0xff]
    %v141 = vld [vmem:[#allocation5 + $0x50] sm:$0xff]
    %v142 = vld [vmem:[#allocation5 + $0x58] sm:$0xff]
    %v143 = vld [vmem:[#allocation5 + $0x60] sm:$0xff]
    %v144 = vld [vmem:[#allocation5 + $0x68] sm:$0xff]
    %v145 = vld [vmem:[#allocation5 + $0x70] sm:$0xff]
    %v146 = vld [vmem:[#allocation5 + $0x78] sm:$0xff]
    %v147 = vld [vmem:[#allocation5 + $0x80] sm:$0xff]
    %v148 = vld [vmem:[#allocation5 + $0x88] sm:$0xff]
    %v149 = vld [vmem:[#allocation5 + $0x90] sm:$0xff]
    %v150 = vld [vmem:[#allocation5 + $0x98] sm:$0xff]
    %v151 = vld [vmem:[#allocation5 + $0xa0] sm:$0xff]
    %v152 = vld [vmem:[#allocation5 + $0xa8] sm:$0xff]
    %v153 = vld [vmem:[#allocation5 + $0xb0] sm:$0xff]
    %v154 = vld [vmem:[#allocation5 + $0xb8] sm:$0xff]
    %v155 = vld [vmem:[#allocation5 + $0xc0] sm:$0xff]
    %v156 = vld [vmem:[#allocation5 + $0xc8] sm:$0xff]
    %v157 = vld [vmem:[#allocation5 + $0xd0] sm:$0xff]
    %v158 = vld [vmem:[#allocation5 + $0xd8] sm:$0xff]
    %v159 = vld [vmem:[#allocation5 + $0xe0] sm:$0xff]
    %v160 = vld [vmem:[#allocation5 + $0xe8] sm:$0xff]
    %v161 = vld [vmem:[#allocation5 + $0xf0] sm:$0xff]
    %v162 = vld [vmem:[#allocation5 + $0xf8] sm:$0xff]
    %v163 = vld [vmem:[%s2] sm:$0x1]
    %v165 = vperm.slane %v163, 0
    %167 = vmatpush.msra.mxu0 %v146
    %168 = vmatpush.msra.mxu0 %v145
    %169 = vmatpush.msra.mxu0 %v144
    %170 = vmatpush.msra.mxu0 %v143
    %171 = vmatpush.msra.mxu0 %v142
    %172 = vmatpush.msra.mxu0 %v141
    %173 = vmatpush.msra.mxu0 %v140
    %174 = vmatpush.msra.mxu0 %v139
    %175 = vmatpush.msra.mxu0 %v138
    %176 = vmatpush.msra.mxu0 %v137
    %177 = vmatpush.msra.mxu0 %v136
    %178 = vmatpush.msra.mxu0 %v135
    %179 = vmatpush.msra.mxu0 %v134
    %180 = vmatpush.msra.mxu0 %v133
    %181 = vmatpush.msra.mxu0 %v132
    %182 = vmatpush.msra.mxu0 %v131
    %183 = vmatmul.f32.gmra.mxu0 %v125
    %v184 = vpop.f32.mrf.mxu0
    %v185 = vadd.f32 %v165, %v184
    %186 = vmatmul.f32.gmra.mxu0 %v127
    %v187 = vpop.f32.mrf.mxu0
    %v188 = vadd.f32 %v165, %v187
    %189 = vmatmul.f32.gmra.mxu0 %v129
    %v190 = vpop.f32.mrf.mxu0
    %v191 = vadd.f32 %v165, %v190
    %192 = vdwg.mxu0
    %193 = vmatpush.msra.mxu0 %v162
    %194 = vmatpush.msra.mxu0 %v161
    %195 = vmatpush.msra.mxu0 %v160
    %196 = vmatpush.msra.mxu0 %v159
    %197 = vmatpush.msra.mxu0 %v158
    %198 = vmatpush.msra.mxu0 %v157
    %199 = vmatpush.msra.mxu0 %v156
    %200 = vmatpush.msra.mxu0 %v155
    %201 = vmatpush.msra.mxu0 %v154
    %202 = vmatpush.msra.mxu0 %v153
    %203 = vmatpush.msra.mxu0 %v152
    %204 = vmatpush.msra.mxu0 %v151
    %205 = vmatpush.msra.mxu0 %v150
    %206 = vmatpush.msra.mxu0 %v149
    %207 = vmatpush.msra.mxu0 %v148
    %208 = vmatpush.msra.mxu0 %v147
    %209 = vmatmul.f32.gmra.mxu0 %v126
    %v210 = vpop.f32.mrf.mxu0
    %v211 = vadd.f32 %v185, %v210
    %212 = vmatmul.f32.gmra.mxu0 %v128
    %v213 = vpop.f32.mrf.mxu0
    %v214 = vadd.f32 %v188, %v213
    %215 = vmatmul.f32.gmra.mxu0 %v130
    %v216 = vpop.f32.mrf.mxu0
    %v217 = vadd.f32 %v191, %v216
    %218 = vdwg.mxu0
    %v219 = vmax.f32 %v211, 0.0
    %v220 = vmax.f32 %v214, 0.0
    %v221 = vmax.f32 %v217, 0.0
    %v222 = vld [vmem:[#allocation7] sm:$0xff]
    %v223 = vld [vmem:[#allocation7 + $0x8] sm:$0xff]
    %v224 = vld [vmem:[#allocation7 + $0x10] sm:$0xff]
    %v225 = vld [vmem:[#allocation7 + $0x18] sm:$0xff]
    %v226 = vld [vmem:[#allocation7 + $0x20] sm:$0xff]
    %v227 = vld [vmem:[#allocation7 + $0x28] sm:$0xff]
    %v228 = vld [vmem:[#allocation7 + $0x30] sm:$0xff]
    %v229 = vld [vmem:[#allocation7 + $0x38] sm:$0xff]
    %v230 = vld [vmem:[#allocation7 + $0x40] sm:$0xff]
    %v231 = vld [vmem:[#allocation7 + $0x48] sm:$0xff]
    %v232 = vld [vmem:[#allocation7 + $0x50] sm:$0xff]
    %v233 = vld [vmem:[#allocation7 + $0x58] sm:$0xff]
    %v234 = vld [vmem:[#allocation7 + $0x60] sm:$0xff]
    %v235 = vld [vmem:[#allocation7 + $0x68] sm:$0xff]
    %v236 = vld [vmem:[#allocation7 + $0x70] sm:$0xff]
    %v237 = vld [vmem:[#allocation7 + $0x78] sm:$0xff]
    %v238 = vld [vmem:[#allocation8] sm:$0x1]
    %v240 = vperm.slane %v238, 0
    %242 = vmatpush.msra.mxu0 %v237
    %243 = vmatpush.msra.mxu0 %v236
    %244 = vmatpush.msra.mxu0 %v235
    %245 = vmatpush.msra.mxu0 %v234
    %246 = vmatpush.msra.mxu0 %v233
    %247 = vmatpush.msra.mxu0 %v232
    %248 = vmatpush.msra.mxu0 %v231
    %249 = vmatpush.msra.mxu0 %v230
    %250 = vmatpush.msra.mxu0 %v229
    %251 = vmatpush.msra.mxu0 %v228
    %252 = vmatpush.msra.mxu0 %v227
    %253 = vmatpush.msra.mxu0 %v226
    %254 = vmatpush.msra.mxu0 %v225
    %255 = vmatpush.msra.mxu0 %v224
    %256 = vmatpush.msra.mxu0 %v223
    %257 = vmatpush.msra.mxu0 %v222
    %258 = vmatmul.f32.gmra.mxu0 %v219
    %v259 = vpop.f32.mrf.mxu0
    %v260 = vadd.f32 %v240, %v259
    %261 = vmatmul.f32.gmra.mxu0 %v220
    %v262 = vpop.f32.mrf.mxu0
    %v263 = vadd.f32 %v240, %v262
    %264 = vmatmul.f32.gmra.mxu0 %v221
    %v265 = vpop.f32.mrf.mxu0
    %v266 = vadd.f32 %v240, %v265
    %267 = vdwg.mxu0
    %v268 = vmax.f32 %v260, 0.0
    %v269 = vmax.f32 %v263, 0.0
    %v270 = vmax.f32 %v266, 0.0
    %v271 = vld [vmem:[#allocation10] sm:$0xff]
    %v272 = vld [vmem:[#allocation10 + $0x8] sm:$0xff]
    %v273 = vld [vmem:[#allocation10 + $0x10] sm:$0xff]
    %v274 = vld [vmem:[#allocation10 + $0x18] sm:$0xff]
    %v275 = vld [vmem:[#allocation10 + $0x20] sm:$0xff]
    %v276 = vld [vmem:[#allocation10 + $0x28] sm:$0xff]
    %v277 = vld [vmem:[#allocation10 + $0x30] sm:$0xff]
    %v278 = vld [vmem:[#allocation10 + $0x38] sm:$0xff]
    %v279 = vld [vmem:[#allocation10 + $0x40] sm:$0xff]
    %v280 = vld [vmem:[#allocation10 + $0x48] sm:$0xff]
    %v281 = vld [vmem:[#allocation10 + $0x50] sm:$0xff]
    %v282 = vld [vmem:[#allocation10 + $0x58] sm:$0xff]
    %v283 = vld [vmem:[#allocation10 + $0x60] sm:$0xff]
    %v284 = vld [vmem:[#allocation10 + $0x68] sm:$0xff]
    %v285 = vld [vmem:[#allocation10 + $0x70] sm:$0xff]
    %v286 = vld [vmem:[#allocation10 + $0x78] sm:$0xff]
    %v287 = vld [vmem:[%s6] sm:$0x1]
    %v289 = vperm.slane %v287, 0
    %291 = vmatpush.msra.mxu0 %v286
    %292 = vmatpush.msra.mxu0 %v285
    %293 = vmatpush.msra.mxu0 %v284
    %294 = vmatpush.msra.mxu0 %v283
    %295 = vmatpush.msra.mxu0 %v282
    %296 = vmatpush.msra.mxu0 %v281
    %297 = vmatpush.msra.mxu0 %v280
    %298 = vmatpush.msra.mxu0 %v279
    %299 = vmatpush.msra.mxu0 %v278
    %300 = vmatpush.msra.mxu0 %v277
    %301 = vmatpush.msra.mxu0 %v276
    %302 = vmatpush.msra.mxu0 %v275
    %303 = vmatpush.msra.mxu0 %v274
    %304 = vmatpush.msra.mxu0 %v273
    %305 = vmatpush.msra.mxu0 %v272
    %306 = vmatpush.msra.mxu0 %v271
    %307 = vmatmul.f32.gmra.mxu0 %v268
    %v308 = vpop.f32.mrf.mxu0
    %v309 = vadd.f32 %v289, %v308
    %310 = vmatmul.f32.gmra.mxu0 %v269
    %v311 = vpop.f32.mrf.mxu0
    %v312 = vadd.f32 %v289, %v311
    %313 = vmatmul.f32.gmra.mxu0 %v270
    %v314 = vpop.f32.mrf.mxu0
    %v315 = vadd.f32 %v289, %v314
    %316 = vdwg.mxu0
    %v317 = vmax.f32 %v309, 0.0
    %v318 = vmax.f32 %v312, 0.0
    %v319 = vmax.f32 %v315, 0.0
    %v320 = vld [vmem:[#allocation11] sm:$0xff]
    %v321 = vld [vmem:[#allocation11 + $0x8] sm:$0xff]
    %v322 = vld [vmem:[#allocation11 + $0x10] sm:$0xff]
    %v323 = vld [vmem:[#allocation11 + $0x18] sm:$0xff]
    %v324 = vld [vmem:[#allocation11 + $0x20] sm:$0xff]
    %v325 = vld [vmem:[#allocation11 + $0x28] sm:$0xff]
    %v326 = vld [vmem:[#allocation11 + $0x30] sm:$0xff]
    %v327 = vld [vmem:[#allocation11 + $0x38] sm:$0xff]
    %v328 = vld [vmem:[#allocation11 + $0x40] sm:$0xff]
    %v329 = vld [vmem:[#allocation11 + $0x48] sm:$0xff]
    %v330 = vld [vmem:[#allocation11 + $0x50] sm:$0xff]
    %v331 = vld [vmem:[#allocation11 + $0x58] sm:$0xff]
    %v332 = vld [vmem:[#allocation11 + $0x60] sm:$0xff]
    %v333 = vld [vmem:[#allocation11 + $0x68] sm:$0xff]
    %v334 = vld [vmem:[#allocation11 + $0x70] sm:$0xff]
    %v335 = vld [vmem:[#allocation11 + $0x78] sm:$0xff]
    %v336 = vld [vmem:[#allocation11 + $0x80] sm:$0xff]
    %v337 = vld [vmem:[#allocation11 + $0x88] sm:$0xff]
    %v338 = vld [vmem:[#allocation11 + $0x90] sm:$0xff]
    %v339 = vld [vmem:[#allocation11 + $0x98] sm:$0xff]
    %v340 = vld [vmem:[#allocation11 + $0xa0] sm:$0xff]
    %v341 = vld [vmem:[#allocation11 + $0xa8] sm:$0xff]
    %v342 = vld [vmem:[#allocation11 + $0xb0] sm:$0xff]
    %v343 = vld [vmem:[#allocation11 + $0xb8] sm:$0xff]
    %v344 = vld [vmem:[#allocation11 + $0xc0] sm:$0xff]
    %v345 = vld [vmem:[#allocation11 + $0xc8] sm:$0xff]
    %v346 = vld [vmem:[#allocation11 + $0xd0] sm:$0xff]
    %v347 = vld [vmem:[#allocation11 + $0xd8] sm:$0xff]
    %v348 = vld [vmem:[#allocation11 + $0xe0] sm:$0xff]
    %v349 = vld [vmem:[#allocation11 + $0xe8] sm:$0xff]
    %v350 = vld [vmem:[#allocation11 + $0xf0] sm:$0xff]
    %v351 = vld [vmem:[#allocation11 + $0xf8] sm:$0xff]
    %v352 = vld [vmem:[%s8] sm:$0x3]
    %v354 = vperm.slane %v352, 0
    %v355 = vperm.slane %v352, 1
    %358 = vmatpush.msra.mxu0 %v350
    %359 = vmatpush.msra.mxu0 %v348
    %360 = vmatpush.msra.mxu0 %v346
    %361 = vmatpush.msra.mxu0 %v344
    %362 = vmatpush.msra.mxu0 %v342
    %363 = vmatpush.msra.mxu0 %v340
    %364 = vmatpush.msra.mxu0 %v338
    %365 = vmatpush.msra.mxu0 %v336
    %366 = vmatpush.msra.mxu0 %v334
    %367 = vmatpush.msra.mxu0 %v332
    %368 = vmatpush.msra.mxu0 %v330
    %369 = vmatpush.msra.mxu0 %v328
    %370 = vmatpush.msra.mxu0 %v326
    %371 = vmatpush.msra.mxu0 %v324
    %372 = vmatpush.msra.mxu0 %v322
    %373 = vmatpush.msra.mxu0 %v320
    %374 = vmatmul.f32.gmra.mxu0 %v317
    %v375 = vpop.f32.mrf.mxu0
    %v376 = vadd.f32 %v354, %v375
    %377 = vmatmul.f32.gmra.mxu0 %v318
    %v378 = vpop.f32.mrf.mxu0
    %v379 = vadd.f32 %v354, %v378
    %380 = vmatmul.f32.gmra.mxu0 %v319
    %v381 = vpop.f32.mrf.mxu0
    %v382 = vadd.f32 %v354, %v381
    %383 = vdwg.mxu0
    %384 = vmatpush.msra.mxu0 %v351
    %385 = vmatpush.msra.mxu0 %v349
    %386 = vmatpush.msra.mxu0 %v347
    %387 = vmatpush.msra.mxu0 %v345
    %388 = vmatpush.msra.mxu0 %v343
    %389 = vmatpush.msra.mxu0 %v341
    %390 = vmatpush.msra.mxu0 %v339
    %391 = vmatpush.msra.mxu0 %v337
    %392 = vmatpush.msra.mxu0 %v335
    %393 = vmatpush.msra.mxu0 %v333
    %394 = vmatpush.msra.mxu0 %v331
    %395 = vmatpush.msra.mxu0 %v329
    %396 = vmatpush.msra.mxu0 %v327
    %397 = vmatpush.msra.mxu0 %v325
    %398 = vmatpush.msra.mxu0 %v323
    %399 = vmatpush.msra.mxu0 %v321
    %400 = vmatmul.f32.gmra.mxu0 %v317
    %v401 = vpop.f32.mrf.mxu0
    %v402 = vadd.f32 %v355, %v401
    %403 = vmatmul.f32.gmra.mxu0 %v318
    %v404 = vpop.f32.mrf.mxu0
    %v405 = vadd.f32 %v355, %v404
    %406 = vmatmul.f32.gmra.mxu0 %v319
    %v407 = vpop.f32.mrf.mxu0
    %v408 = vadd.f32 %v355, %v407
    %409 = vdwg.mxu0
    %v410 = vxor.u32 %v376, 2147483648
    %v411 = vxor.u32 %v402, 2147483648
    %v412 = vxor.u32 %v379, 2147483648
    %v413 = vxor.u32 %v405, 2147483648
    %v414 = vxor.u32 %v382, 2147483648
    %v415 = vxor.u32 %v408, 2147483648
    %v416 = vmul.f32 %v410, 1.442695
    %v417 = vpow.pop %v416
    %v418 = vmul.f32 %v411, 1.442695
    %v419 = vpow.pop %v418
    %v420 = vmul.f32 %v412, 1.442695
    %v421 = vpow.pop %v420
    %v422 = vmul.f32 %v413, 1.442695
    %v423 = vpow.pop %v422
    %v424 = vmul.f32 %v414, 1.442695
    %v425 = vpow.pop %v424
    %v426 = vmul.f32 %v415, 1.442695
    %v427 = vpow.pop %v426
    %v428 = vadd.f32 %v417, 1.0
    %v429 = vadd.f32 %v419, 1.0
    %v430 = vadd.f32 %v421, 1.0
    %v431 = vadd.f32 %v423, 1.0
    %v432 = vadd.f32 %v425, 1.0
    %v433 = vadd.f32 %v427, 1.0
    %v434 = vrcp.pop %v428
    %v435 = vmul.f32 %v428, %v434
    %v436 = vsub.f32 1.0, %v435
    %v437 = vmul.f32 %v434, %v436
    %v438 = vadd.f32 %v434, %v437
    %vm439 = vweird.f32 %v428
    %vm440 = vweird.f32 %v434
    %vm441 = vmor %vm439, %vm440
    %v442 = vsel %vm441, %v434, %v438
    %v443 = vand.u32 2147483647, %v428
    %vm444 = vcmp.eq.f32.partialorder %v443, 8.507059e+37
    %v445 = vand.u32 %v428, 2147483648
    %v446 = vor.u32 1.1754944e-38, %v445
    %v447 = vsel %vm444, %v446, %v442
    %v448 = vmul.f32 1.0, %v447
    %v449 = vrcp.pop %v429
    %v450 = vmul.f32 %v429, %v449
    %v451 = vsub.f32 1.0, %v450
    %v452 = vmul.f32 %v449, %v451
    %v453 = vadd.f32 %v449, %v452
    %vm454 = vweird.f32 %v429
    %vm455 = vweird.f32 %v449
    %vm456 = vmor %vm454, %vm455
    %v457 = vsel %vm456, %v449, %v453
    %v458 = vand.u32 2147483647, %v429
    %vm459 = vcmp.eq.f32.partialorder %v458, 8.507059e+37
    %v460 = vand.u32 %v429, 2147483648
    %v461 = vor.u32 1.1754944e-38, %v460
    %v462 = vsel %vm459, %v461, %v457
    %v463 = vmul.f32 1.0, %v462
    %v464 = vrcp.pop %v430
    %v465 = vmul.f32 %v430, %v464
    %v466 = vsub.f32 1.0, %v465
    %v467 = vmul.f32 %v464, %v466
    %v468 = vadd.f32 %v464, %v467
    %vm469 = vweird.f32 %v430
    %vm470 = vweird.f32 %v464
    %vm471 = vmor %vm469, %vm470
    %v472 = vsel %vm471, %v464, %v468
    %v473 = vand.u32 2147483647, %v430
    %vm474 = vcmp.eq.f32.partialorder %v473, 8.507059e+37
    %v475 = vand.u32 %v430, 2147483648
    %v476 = vor.u32 1.1754944e-38, %v475
    %v477 = vsel %vm474, %v476, %v472
    %v478 = vmul.f32 1.0, %v477
    %v479 = vrcp.pop %v431
    %v480 = vmul.f32 %v431, %v479
    %v481 = vsub.f32 1.0, %v480
    %v482 = vmul.f32 %v479, %v481
    %v483 = vadd.f32 %v479, %v482
    %vm484 = vweird.f32 %v431
    %vm485 = vweird.f32 %v479
    %vm486 = vmor %vm484, %vm485
    %v487 = vsel %vm486, %v479, %v483
    %v488 = vand.u32 2147483647, %v431
    %vm489 = vcmp.eq.f32.partialorder %v488, 8.507059e+37
    %v490 = vand.u32 %v431, 2147483648
    %v491 = vor.u32 1.1754944e-38, %v490
    %v492 = vsel %vm489, %v491, %v487
    %v493 = vmul.f32 1.0, %v492
    %v494 = vrcp.pop %v432
    %v495 = vmul.f32 %v432, %v494
    %v496 = vsub.f32 1.0, %v495
    %v497 = vmul.f32 %v494, %v496
    %v498 = vadd.f32 %v494, %v497
    %vm499 = vweird.f32 %v432
    %vm500 = vweird.f32 %v494
    %vm501 = vmor %vm499, %vm500
    %v502 = vsel %vm501, %v494, %v498
    %v503 = vand.u32 2147483647, %v432
    %vm504 = vcmp.eq.f32.partialorder %v503, 8.507059e+37
    %v505 = vand.u32 %v432, 2147483648
    %v506 = vor.u32 1.1754944e-38, %v505
    %v507 = vsel %vm504, %v506, %v502
    %v508 = vmul.f32 1.0, %v507
    %v509 = vrcp.pop %v433
    %v510 = vmul.f32 %v433, %v509
    %v511 = vsub.f32 1.0, %v510
    %v512 = vmul.f32 %v509, %v511
    %v513 = vadd.f32 %v509, %v512
    %vm514 = vweird.f32 %v433
    %vm515 = vweird.f32 %v509
    %vm516 = vmor %vm514, %vm515
    %v517 = vsel %vm516, %v509, %v513
    %v518 = vand.u32 2147483647, %v433
    %vm519 = vcmp.eq.f32.partialorder %v518, 8.507059e+37
    %v520 = vand.u32 %v433, 2147483648
    %v521 = vor.u32 1.1754944e-38, %v520
    %v522 = vsel %vm519, %v521, %v517
    %v523 = vmul.f32 1.0, %v522
    %524 = vst [vmem:[#allocation13] sm:$0xff] %v448
    %525 = vst [vmem:[#allocation13 + $0x8] sm:$0xff] %v463
    %526 = vst [vmem:[#allocation13 + $0x10] sm:$0xff] %v478
    %527 = vst [vmem:[#allocation13 + $0x18] sm:$0xff] %v493
    %528 = vst [vmem:[#allocation13 + $0x20] sm:$0xff] %v508
    %529 = vst [vmem:[#allocation13 + $0x28] sm:$0xff] %v523
    // Predicated region
    $region62: #{tpu_custom_call.1} parent=1 // pred_check
      _
    $region63: #{tpu_custom_call.1} parent=1 // pred_check_branch
      %531 = sbr.rel (0) target = $region65
    $region64: #{tpu_custom_call.1} parent=1 // pred_region
      %533 = vsyncadd [#allocation4], 0
      %s534 = sshll.u32 [#allocation13], 4
      %s535 = int_to_ptr.vmem [resolvable:$true] %s534
      %s536 = sshll.u32 %s9, 4
      %s537 = int_to_ptr.hbm [resolvable:$true] %s536
      %542 = dma.vmem_to_hbm [thread:$0]  %s535, 768, %s537, [#allocation4], 256, 256, 16
    $region65: #{tpu_custom_call.1} parent=1 // pred_fallthru
      _
    // Predicated region
    $region66: #{tpu_custom_call.1} parent=1 // pred_check
      _
    $region67: #{tpu_custom_call.1} parent=1 // pred_check_branch
      %544 = sbr.rel (0) target = $region69
    $region68: #{tpu_custom_call.1} parent=1 // pred_region
      %546 = dma.done [#allocation4], 768
    $region69: #{tpu_custom_call.1} parent=1 // pred_fallthru
      _
    %547 = vsyncpa [#allocation3], 1
    %548 = vsyncpa [#allocation6], 1
    %549 = vsyncpa [#allocation9], 1
    %550 = vsyncpa [#allocation12], 1
    %551 = vsyncpa [#allocation4], 1

</llo_original>
